<compile_context>
chip_gen: v7x
topology: tpu7x:2x2x1
jax: 0.10.0
libtpu: 0.0.40
codegen_flags: <defaults>
</compile_context>

<pallas_src>
import jax
import jax.numpy as jnp
from jax.experimental import pallas as pl
from jax.experimental.pallas import tpu as pltpu

LANE = 128
SUBLANE = 8


def _pad2(x, rows, cols):
    r, c = x.shape
    if r == rows and c == cols:
        return x
    return jnp.pad(x, ((0, rows - r), (0, cols - c)))


def _make_kernel(matmul_dtype):
    def rbfn_kernel(xa_ref, xb_ref, scale_ref, offset_ref, ct_ref, csq_ref,
                    inv_ref, w_ref, b_ref, o_ref):
        # u = _normalize(2*x_a - x_b), with the batch min/max folded into
        # scale/offset precomputed in the wrapper.
        u = (2.0 * xa_ref[...] - xb_ref[...]) * scale_ref[...] + offset_ref[...]

        # ||u - c||^2 = ||u||^2 - 2 u.c + ||c||^2 ; cross term on the MXU.
        u_sq = jnp.sum(u * u, axis=-1, keepdims=True)                     # (TB, 1)
        cross = jnp.dot(u.astype(matmul_dtype),
                        ct_ref[...].astype(matmul_dtype),
                        preferred_element_type=jnp.float32)               # (TB, K)
        sq = jnp.maximum(u_sq - 2.0 * cross + csq_ref[...], 0.0)          # (TB, K)

        # gaussian(dist) = exp(-(||u-c||/sigma)^2) = exp(-sq * exp(-2*log_sigma)); no sqrt.
        y = jnp.exp(-sq * inv_ref[...])                                   # (TB, K)

        # Linear + sigmoid (second MXU matmul, EUP for exp inside sigmoid).
        z = jnp.dot(y.astype(matmul_dtype),
                    w_ref[...].astype(matmul_dtype),
                    preferred_element_type=jnp.float32) + b_ref[...]      # (TB, O)
        o_ref[...] = jax.nn.sigmoid(z)

    return rbfn_kernel


def rbfn_forward(x_a, x_b, centres, log_sigmas, weight, bias,
                 *, tile_b=512, use_bf16_matmul=False):
    """weight has the torch nn.Linear layout (O, K); bias is (O,)."""
    x_a = jnp.asarray(x_a, jnp.float32)
    x_b = jnp.asarray(x_b, jnp.float32)
    centres = jnp.asarray(centres, jnp.float32)
    log_sigmas = jnp.asarray(log_sigmas, jnp.float32)
    weight = jnp.asarray(weight, jnp.float32)
    bias = jnp.asarray(bias, jnp.float32)

    B, D = x_a.shape
    K, _ = centres.shape
    O = weight.shape[0]

    # Full-batch normalization stats (tiny XLA reduce; must NOT be done per B-tile).
    x = 2.0 * x_a - x_b
    mn = jnp.min(x, axis=0, keepdims=True)
    rng = jnp.max(x, axis=0, keepdims=True) - mn
    rng = jnp.where(rng == 0.0, 1.0, rng)
    scale = 2.0 / rng                          # (1, D)
    offset = -1.0 - mn * scale                 # (1, D)

    c_sq = jnp.sum(centres * centres, axis=1)[None, :]      # (1, K)
    inv_sig_sq = jnp.exp(-2.0 * log_sigmas)[None, :]        # (1, K)

    # Pad lane dims to 128 and the batch to a multiple of the tile.
    D_p = max(LANE, pl.cdiv(D, LANE) * LANE)
    K_p = max(LANE, pl.cdiv(K, LANE) * LANE)
    O_p = max(LANE, pl.cdiv(O, LANE) * LANE)
    TILE_B = min(tile_b, pl.cdiv(B, SUBLANE) * SUBLANE)
    B_p = pl.cdiv(B, TILE_B) * TILE_B

    xa_p = _pad2(x_a, B_p, D_p)
    xb_p = _pad2(x_b, B_p, D_p)
    scale_p = _pad2(scale, 1, D_p)             # padded D cols have scale/offset 0 -> u=0
    offset_p = _pad2(offset, 1, D_p)
    ct_p = _pad2(centres.T, D_p, K_p)          # zero-padded rows/cols
    csq_p = _pad2(c_sq, 1, K_p)
    inv_p = _pad2(inv_sig_sq, 1, K_p)          # padded K -> inv=0 -> y=1, but ...
    w_p = _pad2(weight.T, K_p, O_p)            # ... padded weight rows are 0 -> no contribution
    b_p = _pad2(bias[None, :], 1, O_p)

    grid = (B_p // TILE_B,)

    def tiled(shape):
        return pl.BlockSpec(shape, lambda i: (i, 0))

    def resident(shape):
        return pl.BlockSpec(shape, lambda i: (0, 0))

    # Explicit VMEM budget (v7x has only 64 MiB physical): double-buffered tiles
    # plus resident parameter slabs, with ~2x headroom.
    tile_bytes = 2 * TILE_B * (2 * D_p + O_p) * 4
    res_bytes = 2 * (2 * D_p + D_p * K_p + 2 * K_p + K_p * O_p + O_p) * 4
    vmem_bytes = min(64 * 1024 * 1024,
                     max(4 * 1024 * 1024, 2 * (tile_bytes + res_bytes)))

    matmul_dtype = jnp.bfloat16 if use_bf16_matmul else jnp.float32

    out_p = pl.pallas_call(
        _make_kernel(matmul_dtype),
        out_shape=jax.ShapeDtypeStruct((B_p, O_p), jnp.float32),
        grid_spec=pltpu.PrefetchScalarGridSpec(
            num_scalar_prefetch=0,
            grid=grid,
            in_specs=[
                tiled((TILE_B, D_p)),     # x_a tile
                tiled((TILE_B, D_p)),     # x_b tile
                resident((1, D_p)),       # normalization scale
                resident((1, D_p)),       # normalization offset
                resident((D_p, K_p)),     # centres^T
                resident((1, K_p)),       # ||c||^2
                resident((1, K_p)),       # exp(-2*log_sigma)
                resident((K_p, O_p)),     # linear weight (K, O)
                resident((1, O_p)),       # linear bias
            ],
            out_specs=tiled((TILE_B, O_p)),
        ),
        compiler_params=pltpu.CompilerParams(
            dimension_semantics=("parallel",),
            vmem_limit_bytes=vmem_bytes,
        ),
    )(xa_p, xb_p, scale_p, offset_p, ct_p, csq_p, inv_p, w_p, b_p)

    return out_p[:B, :O]


def _reference(x_a, x_b, centres, log_sigmas, weight, bias):
    # Direct translation of the torch module's forward (f32, no matmul identity).
    x = 2.0 * x_a - x_b
    mn = jnp.min(x, axis=0, keepdims=True)
    mx = jnp.max(x, axis=0, keepdims=True)
    rng = jnp.where(mx - mn == 0.0, 1.0, mx - mn)
    u = -1.0 + 2.0 * (x - mn) / rng
    diff = u[:, None, :] - centres[None, :, :]
    dist = jnp.sqrt(jnp.sum(diff * diff, axis=-1)) / jnp.exp(log_sigmas)[None, :]
    y = jnp.exp(-(dist * dist))
    return jax.nn.sigmoid(y @ weight.T + bias[None, :])


if __name__ == "__main__":
    # Small shapes consistent with the module: (batch, input_dim) inputs.
    B, D, K, O = 8, 16, 32, 4

    key = jax.random.PRNGKey(0)
    k_xa, k_xb, k_c, k_w, k_b = jax.random.split(key, 5)

    x_a = jax.random.normal(k_xa, (B, D), dtype=jnp.float32)
    x_b = jax.random.normal(k_xb, (B, D), dtype=jnp.float32)

    # Deterministic parameter init mirroring the torch module:
    #   centres ~ N(0, 1), log_sigmas = 0, Linear: U(-1/sqrt(K), 1/sqrt(K)).
    centres = jax.random.normal(k_c, (K, D), dtype=jnp.float32)
    log_sigmas = jnp.zeros((K,), dtype=jnp.float32)
    bound = 1.0 / float(K) ** 0.5
    weight = jax.random.uniform(k_w, (O, K), minval=-bound, maxval=bound, dtype=jnp.float32)
    bias = jax.random.uniform(k_b, (O,), minval=-bound, maxval=bound, dtype=jnp.float32)

    out = rbfn_forward(x_a, x_b, centres, log_sigmas, weight, bias)
    out = jax.block_until_ready(out)

    ref = _reference(x_a, x_b, centres, log_sigmas, weight, bias)
    assert out.shape == (B, O)
    assert jnp.allclose(out, ref, atol=1e-4, rtol=1e-4), float(jnp.max(jnp.abs(out - ref)))

    print("KERNEL_OK")
</pallas_src>

<mosaic_0001>
module attributes {stable_mosaic.version = 11 : i64} {
  func.func @rbfn_kernel(%arg0: i32, %arg1: memref<8x128xf32, #tpu.memory_space<vmem>>, %arg2: memref<8x128xf32, #tpu.memory_space<vmem>>, %arg3: memref<1x128xf32, #tpu.memory_space<vmem>>, %arg4: memref<1x128xf32, #tpu.memory_space<vmem>>, %arg5: memref<128x128xf32, #tpu.memory_space<vmem>>, %arg6: memref<1x128xf32, #tpu.memory_space<vmem>>, %arg7: memref<1x128xf32, #tpu.memory_space<vmem>>, %arg8: memref<128x128xf32, #tpu.memory_space<vmem>>, %arg9: memref<1x128xf32, #tpu.memory_space<vmem>>, %arg10: memref<8x128xf32, #tpu.memory_space<vmem>>) attributes {dimension_semantics = [#tpu.dimension_semantics<parallel>], iteration_bounds = array<i64: 1>, scalar_prefetch = 0 : i64, scratch_operands = 0 : i64, tpu.core_type = #tpu.core_type<tc>, window_params = [{transform_indices = @transform_0, window_bounds = array<i64: 8, 128>}, {transform_indices = @transform_1, window_bounds = array<i64: 8, 128>}, {pipeline_mode = #tpu.pipeline_mode<synchronous>, transform_indices = @transform_2, window_bounds = array<i64: 1, 128>}, {pipeline_mode = #tpu.pipeline_mode<synchronous>, transform_indices = @transform_3, window_bounds = array<i64: 1, 128>}, {pipeline_mode = #tpu.pipeline_mode<synchronous>, transform_indices = @transform_4, window_bounds = array<i64: 128, 128>}, {pipeline_mode = #tpu.pipeline_mode<synchronous>, transform_indices = @transform_5, window_bounds = array<i64: 1, 128>}, {pipeline_mode = #tpu.pipeline_mode<synchronous>, transform_indices = @transform_6, window_bounds = array<i64: 1, 128>}, {pipeline_mode = #tpu.pipeline_mode<synchronous>, transform_indices = @transform_7, window_bounds = array<i64: 128, 128>}, {pipeline_mode = #tpu.pipeline_mode<synchronous>, transform_indices = @transform_8, window_bounds = array<i64: 1, 128>}, {transform_indices = @transform_9, window_bounds = array<i64: 8, 128>}]} {
    %c0 = arith.constant 0 : index
    %c0_0 = arith.constant 0 : index
    %0 = vector.load %arg1[%c0, %c0_0] : memref<8x128xf32, #tpu.memory_space<vmem>>, vector<8x128xf32>
    %cst = arith.constant 2.000000e+00 : f32
    %1 = vector.broadcast %cst : f32 to vector<8x128xf32>
    %2 = arith.mulf %1, %0 : vector<8x128xf32>
    %c0_1 = arith.constant 0 : index
    %c0_2 = arith.constant 0 : index
    %3 = vector.load %arg2[%c0_1, %c0_2] : memref<8x128xf32, #tpu.memory_space<vmem>>, vector<8x128xf32>
    %4 = arith.subf %2, %3 : vector<8x128xf32>
    %c0_3 = arith.constant 0 : index
    %c0_4 = arith.constant 0 : index
    %5 = vector.load %arg3[%c0_3, %c0_4] : memref<1x128xf32, #tpu.memory_space<vmem>>, vector<1x128xf32>
    %6 = vector.broadcast %5 : vector<1x128xf32> to vector<8x128xf32>
    %7 = arith.mulf %4, %6 : vector<8x128xf32>
    %c0_5 = arith.constant 0 : index
    %c0_6 = arith.constant 0 : index
    %8 = vector.load %arg4[%c0_5, %c0_6] : memref<1x128xf32, #tpu.memory_space<vmem>>, vector<1x128xf32>
    %9 = vector.broadcast %8 : vector<1x128xf32> to vector<8x128xf32>
    %10 = arith.addf %7, %9 : vector<8x128xf32>
    %11 = arith.mulf %10, %10 : vector<8x128xf32>
    %cst_7 = arith.constant dense<0.000000e+00> : vector<8xf32>
    %12 = vector.multi_reduction <add>, %11, %cst_7 [1] : vector<8x128xf32> to vector<8xf32>
    %13 = vector.shape_cast %12 : vector<8xf32> to vector<8x1xf32>
    %c0_8 = arith.constant 0 : index
    %c0_9 = arith.constant 0 : index
    %14 = vector.load %arg5[%c0_8, %c0_9] : memref<128x128xf32, #tpu.memory_space<vmem>>, vector<128x128xf32>
    %cst_10 = arith.constant dense<0.000000e+00> : vector<8x128xf32>
    %15 = tpu.matmul %10, %14, %cst_10 {dimension_numbers = #tpu.dot_dimension_numbers<[1], [0], [0], [1], [0, 0, 1, 1], [], []>} : vector<8x128xf32>, vector<128x128xf32>, vector<8x128xf32> -> vector<8x128xf32>
    %cst_11 = arith.constant 2.000000e+00 : f32
    %16 = vector.broadcast %cst_11 : f32 to vector<8x128xf32>
    %17 = arith.mulf %16, %15 : vector<8x128xf32>
    %18 = vector.broadcast %13 : vector<8x1xf32> to vector<8x128xf32>
    %19 = arith.subf %18, %17 : vector<8x128xf32>
    %c0_12 = arith.constant 0 : index
    %c0_13 = arith.constant 0 : index
    %20 = vector.load %arg6[%c0_12, %c0_13] : memref<1x128xf32, #tpu.memory_space<vmem>>, vector<1x128xf32>
    %21 = vector.broadcast %20 : vector<1x128xf32> to vector<8x128xf32>
    %22 = arith.addf %19, %21 : vector<8x128xf32>
    %cst_14 = arith.constant 0.000000e+00 : f32
    %23 = vector.broadcast %cst_14 : f32 to vector<8x128xf32>
    %24 = arith.maximumf %22, %23 : vector<8x128xf32>
    %cst_15 = arith.constant 0.000000e+00 : f32
    %25 = vector.broadcast %cst_15 : f32 to vector<8x128xf32>
    %26 = arith.subf %25, %24 : vector<8x128xf32>
    %c0_16 = arith.constant 0 : index
    %c0_17 = arith.constant 0 : index
    %27 = vector.load %arg7[%c0_16, %c0_17] : memref<1x128xf32, #tpu.memory_space<vmem>>, vector<1x128xf32>
    %28 = vector.broadcast %27 : vector<1x128xf32> to vector<8x128xf32>
    %29 = arith.mulf %26, %28 : vector<8x128xf32>
    %30 = math.exp %29 : vector<8x128xf32>
    %c0_18 = arith.constant 0 : index
    %c0_19 = arith.constant 0 : index
    %31 = vector.load %arg8[%c0_18, %c0_19] : memref<128x128xf32, #tpu.memory_space<vmem>>, vector<128x128xf32>
    %cst_20 = arith.constant dense<0.000000e+00> : vector<8x128xf32>
    %32 = tpu.matmul %30, %31, %cst_20 {dimension_numbers = #tpu.dot_dimension_numbers<[1], [0], [0], [1], [0, 0, 1, 1], [], []>} : vector<8x128xf32>, vector<128x128xf32>, vector<8x128xf32> -> vector<8x128xf32>
    %c0_21 = arith.constant 0 : index
    %c0_22 = arith.constant 0 : index
    %33 = vector.load %arg9[%c0_21, %c0_22] : memref<1x128xf32, #tpu.memory_space<vmem>>, vector<1x128xf32>
    %34 = vector.broadcast %33 : vector<1x128xf32> to vector<8x128xf32>
    %35 = arith.addf %32, %34 : vector<8x128xf32>
    %36 = arith.negf %35 : vector<8x128xf32>
    %37 = math.exp %36 : vector<8x128xf32>
    %cst_23 = arith.constant 1.000000e+00 : f32
    %38 = vector.broadcast %cst_23 : f32 to vector<8x128xf32>
    %39 = arith.addf %38, %37 : vector<8x128xf32>
    %40 = arith.divf %38, %39 : vector<8x128xf32>
    %c0_24 = arith.constant 0 : index
    %c0_25 = arith.constant 0 : index
    %41 = vector.load %arg10[%c0_24, %c0_25] : memref<8x128xf32, #tpu.memory_space<vmem>>, vector<8x128xf32>
    tpu.vector_store %arg10[%c0_24, %c0_25], %40 {strides = array<i32>} : memref<8x128xf32, #tpu.memory_space<vmem>>, vector<8x128xf32>,
    return
  }
  func.func @transform_0(%arg0: i32) -> (i32, i32) {
    %c0_i32 = arith.constant 0 : i32
    %c0_i32_0 = arith.constant 0 : i32
    return %arg0, %c0_i32 : i32, i32
  }
  func.func @transform_1(%arg0: i32) -> (i32, i32) {
    %c0_i32 = arith.constant 0 : i32
    %c0_i32_0 = arith.constant 0 : i32
    return %arg0, %c0_i32 : i32, i32
  }
  func.func @transform_2(%arg0: i32) -> (i32, i32) {
    %c0_i32 = arith.constant 0 : i32
    %c0_i32_0 = arith.constant 0 : i32
    %c0_i32_1 = arith.constant 0 : i32
    return %c0_i32, %c0_i32_0 : i32, i32
  }
  func.func @transform_3(%arg0: i32) -> (i32, i32) {
    %c0_i32 = arith.constant 0 : i32
    %c0_i32_0 = arith.constant 0 : i32
    %c0_i32_1 = arith.constant 0 : i32
    return %c0_i32, %c0_i32_0 : i32, i32
  }
  func.func @transform_4(%arg0: i32) -> (i32, i32) {
    %c0_i32 = arith.constant 0 : i32
    %c0_i32_0 = arith.constant 0 : i32
    %c0_i32_1 = arith.constant 0 : i32
    return %c0_i32, %c0_i32_0 : i32, i32
  }
  func.func @transform_5(%arg0: i32) -> (i32, i32) {
    %c0_i32 = arith.constant 0 : i32
    %c0_i32_0 = arith.constant 0 : i32
    %c0_i32_1 = arith.constant 0 : i32
    return %c0_i32, %c0_i32_0 : i32, i32
  }
  func.func @transform_6(%arg0: i32) -> (i32, i32) {
    %c0_i32 = arith.constant 0 : i32
    %c0_i32_0 = arith.constant 0 : i32
    %c0_i32_1 = arith.constant 0 : i32
    return %c0_i32, %c0_i32_0 : i32, i32
  }
  func.func @transform_7(%arg0: i32) -> (i32, i32) {
    %c0_i32 = arith.constant 0 : i32
    %c0_i32_0 = arith.constant 0 : i32
    %c0_i32_1 = arith.constant 0 : i32
    return %c0_i32, %c0_i32_0 : i32, i32
  }
  func.func @transform_8(%arg0: i32) -> (i32, i32) {
    %c0_i32 = arith.constant 0 : i32
    %c0_i32_0 = arith.constant 0 : i32
    %c0_i32_1 = arith.constant 0 : i32
    return %c0_i32, %c0_i32_0 : i32, i32
  }
  func.func @transform_9(%arg0: i32) -> (i32, i32) {
    %c0_i32 = arith.constant 0 : i32
    %c0_i32_0 = arith.constant 0 : i32
    return %arg0, %c0_i32 : i32, i32
  }
}

</mosaic_0001>

<llo_original>
// kernel: tpu_custom_call.1
$region0: #{tpu_custom_call.1}
  #allocation0 [shape = 'u32[]', space=smem, size = 0x4, offset = 0x4, fixed_abs, tag = 'smem constant byte address 0x4 - core index']
  #allocation1 [shape = 'u32[144,128]{1,0:T(1,128)}', space=vmem, size = 0x12000, scoped, tag = 'internal scratch']
  %s0 = inlined_call_operand.hbm [shape: f32[8,128], index: 0, kind: input, shape index: {}]
  %s1 = inlined_call_operand.hbm [shape: f32[8,128], index: 1, kind: input, shape index: {}]
  %s2 = inlined_call_operand.vmem [shape: f32[1,128], index: 2, kind: input, shape index: {}]
  %s3 = inlined_call_operand.vmem [shape: f32[1,128], index: 3, kind: input, shape index: {}]
  %s4 = inlined_call_operand.hbm [shape: f32[128,128], index: 4, kind: input, shape index: {}]
  %s5 = inlined_call_operand.vmem [shape: f32[1,128], index: 5, kind: input, shape index: {}]
  %s6 = inlined_call_operand.vmem [shape: f32[1,128], index: 6, kind: input, shape index: {}]
  %s7 = inlined_call_operand.hbm [shape: f32[128,128], index: 7, kind: input, shape index: {}]
  %s8 = inlined_call_operand.vmem [shape: f32[1,128], index: 8, kind: input, shape index: {}]
  %s9 = inlined_call_operand.hbm [shape: f32[8,128], index: 9, kind: output, shape index: {}]
  %s10 = sld [smem:[#allocation0]]
  $region62: #{tpu_custom_call.1} parent=0
    _
  %s12 = ssub.s32 1, %s10
  %s13 = scalar_select 0, %s12, %s10
  $region1: #{tpu_custom_call.1} parent=0
    #allocation2 [shape = 'u8[4096]{0}', space=vmem, size = 0x1000, scoped, tag = 'input window, operand 0, single buffered']
    #allocation3 [shape = 's32[1]{0}', space=sflag, size = 0x4, scoped, tag = 'scoped memory for tpu_custom_call.1']
    #allocation4 [shape = 's32[1]{0}', space=sflag, size = 0x4, scoped, tag = 'scoped memory for tpu_custom_call.1']
    #allocation5 [shape = 'u8[4096]{0}', space=vmem, size = 0x1000, scoped, tag = 'input window, operand 1, single buffered']
    #allocation6 [shape = 's32[1]{0}', space=sflag, size = 0x4, scoped, tag = 'scoped memory for tpu_custom_call.1']
    #allocation7 [shape = 'u8[65536]{0}', space=vmem, size = 0x10000, scoped, tag = 'input window, operand 4, single buffered']
    #allocation8 [shape = 'u8[65536]{0}', space=vmem, size = 0x10000, scoped, tag = 'input window, operand 7, single buffered']
    #allocation9 [shape = 's32[1]{0}', space=sflag, size = 0x4, scoped, tag = 'scoped memory for tpu_custom_call.1']
    #allocation10 [shape = 'u8[4096]{0}', space=vmem, size = 0x1000, scoped, tag = 'output window, operand 0, single buffered']
    %14 = vsyncpa [#allocation3], 0
    %15 = vsyncpa [#allocation6], 0
    %16 = vsyncpa [#allocation9], 0
    %17 = vsyncpa [#allocation4], 0
    // Predicated region
    $region2: #{tpu_custom_call.1} parent=1 // pred_check
      _
    $region3: #{tpu_custom_call.1} parent=1 // pred_check_branch
      %19 = sbr.rel (0) target = $region5
    $region4: #{tpu_custom_call.1} parent=1 // pred_region
      %s21 = ssub.s32 128, 128
      %22 = vsyncadd [#allocation3], %s21
      %s24 = sshll.u32 [#allocation2], 4
      %s25 = int_to_ptr.vmem [resolvable:$true] %s24
      %27 = dma.hbm_to_vmem [thread:$0]  %s0, 128, %s25, [#allocation3]
    $region5: #{tpu_custom_call.1} parent=1 // pred_fallthru
      _
    // Predicated region
    $region6: #{tpu_custom_call.1} parent=1 // pred_check
      _
    $region7: #{tpu_custom_call.1} parent=1 // pred_check_branch
      %29 = sbr.rel (0) target = $region9
    $region8: #{tpu_custom_call.1} parent=1 // pred_region
      %s31 = ssub.s32 128, 128
      %32 = vsyncadd [#allocation6], %s31
      %s34 = sshll.u32 [#allocation5], 4
      %s35 = int_to_ptr.vmem [resolvable:$true] %s34
      %37 = dma.hbm_to_vmem [thread:$0]  %s1, 128, %s35, [#allocation6]
    $region9: #{tpu_custom_call.1} parent=1 // pred_fallthru
      _
    // Predicated region
    $region10: #{tpu_custom_call.1} parent=1 // pred_check
      _
    $region11: #{tpu_custom_call.1} parent=1 // pred_check_branch
      %39 = sbr.rel (0) target = $region13
    $region12: #{tpu_custom_call.1} parent=1 // pred_region
      _
    $region13: #{tpu_custom_call.1} parent=1 // pred_fallthru
      _
    // Predicated region
    $region14: #{tpu_custom_call.1} parent=1 // pred_check
      _
    $region15: #{tpu_custom_call.1} parent=1 // pred_check_branch
      %41 = sbr.rel (0) target = $region17
    $region16: #{tpu_custom_call.1} parent=1 // pred_region
      _
    $region17: #{tpu_custom_call.1} parent=1 // pred_fallthru
      _
    // Predicated region
    $region18: #{tpu_custom_call.1} parent=1 // pred_check
      _
    $region19: #{tpu_custom_call.1} parent=1 // pred_check_branch
      %43 = sbr.rel (0) target = $region21
    $region20: #{tpu_custom_call.1} parent=1 // pred_region
      %s45 = ssub.s32 2048, 2048
      %46 = vsyncadd [#allocation6], %s45
      %s47 = sshll.u32 [#allocation7], 4
      %s48 = int_to_ptr.vmem [resolvable:$true] %s47
      %53 = dma.hbm_to_vmem [thread:$0]  %s4, 2048, %s48, [#allocation6], 128, 128, 8
    $region21: #{tpu_custom_call.1} parent=1 // pred_fallthru
      _
    // Predicated region
    $region22: #{tpu_custom_call.1} parent=1 // pred_check
      _
    $region23: #{tpu_custom_call.1} parent=1 // pred_check_branch
      %55 = sbr.rel (0) target = $region25
    $region24: #{tpu_custom_call.1} parent=1 // pred_region
      _
    $region25: #{tpu_custom_call.1} parent=1 // pred_fallthru
      _
    // Predicated region
    $region26: #{tpu_custom_call.1} parent=1 // pred_check
      _
    $region27: #{tpu_custom_call.1} parent=1 // pred_check_branch
      %57 = sbr.rel (0) target = $region29
    $region28: #{tpu_custom_call.1} parent=1 // pred_region
      _
    $region29: #{tpu_custom_call.1} parent=1 // pred_fallthru
      _
    // Predicated region
    $region30: #{tpu_custom_call.1} parent=1 // pred_check
      _
    $region31: #{tpu_custom_call.1} parent=1 // pred_check_branch
      %59 = sbr.rel (0) target = $region33
    $region32: #{tpu_custom_call.1} parent=1 // pred_region
      %s61 = ssub.s32 2048, 2048
      %62 = vsyncadd [#allocation9], %s61
      %s63 = sshll.u32 [#allocation8], 4
      %s64 = int_to_ptr.vmem [resolvable:$true] %s63
      %69 = dma.hbm_to_vmem [thread:$0]  %s7, 2048, %s64, [#allocation9], 128, 128, 8
    $region33: #{tpu_custom_call.1} parent=1 // pred_fallthru
      _
    // Predicated region
    $region34: #{tpu_custom_call.1} parent=1 // pred_check
      _
    $region35: #{tpu_custom_call.1} parent=1 // pred_check_branch
      %71 = sbr.rel (0) target = $region37
    $region36: #{tpu_custom_call.1} parent=1 // pred_region
      _
    $region37: #{tpu_custom_call.1} parent=1 // pred_fallthru
      _
    // Predicated region
    $region38: #{tpu_custom_call.1} parent=1 // pred_check
      _
    $region39: #{tpu_custom_call.1} parent=1 // pred_check_branch
      %73 = sbr.rel (0) target = $region41
    $region40: #{tpu_custom_call.1} parent=1 // pred_region
      %74 = dma.done [#allocation3], 128
    $region41: #{tpu_custom_call.1} parent=1 // pred_fallthru
      _
    // Predicated region
    $region42: #{tpu_custom_call.1} parent=1 // pred_check
      _
    $region43: #{tpu_custom_call.1} parent=1 // pred_check_branch
      %76 = sbr.rel (0) target = $region45
    $region44: #{tpu_custom_call.1} parent=1 // pred_region
      %77 = dma.done [#allocation6], 128
    $region45: #{tpu_custom_call.1} parent=1 // pred_fallthru
      _
    // Predicated region
    $region46: #{tpu_custom_call.1} parent=1 // pred_check
      _
    $region47: #{tpu_custom_call.1} parent=1 // pred_check_branch
      %79 = sbr.rel (0) target = $region49
    $region48: #{tpu_custom_call.1} parent=1 // pred_region
      %80 = dma.done [#allocation6], 2048
    $region49: #{tpu_custom_call.1} parent=1 // pred_fallthru
      _
    // Predicated region
    $region50: #{tpu_custom_call.1} parent=1 // pred_check
      _
    $region51: #{tpu_custom_call.1} parent=1 // pred_check_branch
      %82 = sbr.rel (0) target = $region53
    $region52: #{tpu_custom_call.1} parent=1 // pred_region
      %83 = dma.done [#allocation9], 2048
    $region53: #{tpu_custom_call.1} parent=1 // pred_fallthru
      _
    %v84 = vld [vmem:[#allocation2] sm:$0xff]
    %v85 = vmul.f32 %v84, 2.0
    %v86 = vld [vmem:[#allocation5] sm:$0xff]
    %v87 = vsub.f32 %v85, %v86
    %v88 = vld [vmem:[%s2] sm:$0x1]
    %v90 = vlaneseq
    %v91 = vshrl.u32 %v90, 7
    %v92 = vsub.s32 0, %v91
    %v93 = vrot.slane %v88, %v92
    %v95 = vmul.f32 %v87, %v93
    %v96 = vld [vmem:[%s3] sm:$0x1]
    %v98 = vlaneseq
    %v99 = vshrl.u32 %v98, 7
    %v100 = vsub.s32 0, %v99
    %v101 = vrot.slane %v96, %v100
    %v103 = vadd.f32 %v95, %v101
    %v104 = vmul.f32 %v103, %v103
    %105 = vadd.xlane.f32.xlu0 %v104
    %v106 = vpop.xlane.xlu0 %105
    %v107 = vld [vmem:[#allocation7] sm:$0xff]
    %v108 = vld [vmem:[#allocation7 + $0x8] sm:$0xff]
    %v109 = vld [vmem:[#allocation7 + $0x10] sm:$0xff]
    %v110 = vld [vmem:[#allocation7 + $0x18] sm:$0xff]
    %v111 = vld [vmem:[#allocation7 + $0x20] sm:$0xff]
    %v112 = vld [vmem:[#allocation7 + $0x28] sm:$0xff]
    %v113 = vld [vmem:[#allocation7 + $0x30] sm:$0xff]
    %v114 = vld [vmem:[#allocation7 + $0x38] sm:$0xff]
    %v115 = vld [vmem:[#allocation7 + $0x40] sm:$0xff]
    %v116 = vld [vmem:[#allocation7 + $0x48] sm:$0xff]
    %v117 = vld [vmem:[#allocation7 + $0x50] sm:$0xff]
    %v118 = vld [vmem:[#allocation7 + $0x58] sm:$0xff]
    %v119 = vld [vmem:[#allocation7 + $0x60] sm:$0xff]
    %v120 = vld [vmem:[#allocation7 + $0x68] sm:$0xff]
    %v121 = vld [vmem:[#allocation7 + $0x70] sm:$0xff]
    %v122 = vld [vmem:[#allocation7 + $0x78] sm:$0xff]
    %123 = vmatprep.subr.mxu0 0.0
    %124 = vmatpush1.msra.mxu0 %v107
    %125 = vmatprep.subr.mxu0 0.0
    %126 = vmatpush1.msra.mxu0 %v108
    %127 = vmatprep.subr.mxu0 0.0
    %128 = vmatpush1.msra.mxu0 %v109
    %129 = vmatprep.subr.mxu0 0.0
    %130 = vmatpush1.msra.mxu0 %v110
    %131 = vmatprep.subr.mxu0 0.0
    %132 = vmatpush1.msra.mxu0 %v111
    %133 = vmatprep.subr.mxu0 0.0
    %134 = vmatpush1.msra.mxu0 %v112
    %135 = vmatprep.subr.mxu0 0.0
    %136 = vmatpush1.msra.mxu0 %v113
    %137 = vmatprep.subr.mxu0 0.0
    %138 = vmatpush1.msra.mxu0 %v114
    %139 = vmatprep.subr.mxu0 0.0
    %140 = vmatpush1.msra.mxu0 %v115
    %141 = vmatprep.subr.mxu0 0.0
    %142 = vmatpush1.msra.mxu0 %v116
    %143 = vmatprep.subr.mxu0 0.0
    %144 = vmatpush1.msra.mxu0 %v117
    %145 = vmatprep.subr.mxu0 0.0
    %146 = vmatpush1.msra.mxu0 %v118
    %147 = vmatprep.subr.mxu0 0.0
    %148 = vmatpush1.msra.mxu0 %v119
    %149 = vmatprep.subr.mxu0 0.0
    %150 = vmatpush1.msra.mxu0 %v120
    %151 = vmatprep.subr.mxu0 0.0
    %152 = vmatpush1.msra.mxu0 %v121
    %153 = vmatprep.subr.mxu0 0.0
    %154 = vmatpush1.msra.mxu0 %v122
    %155 = vmatprep.subr.mxu0 0.0
    %156 = vmatpush1.msra.mxu0 0.0
    %157 = vmatprep.subr.mxu0 0.0
    %158 = vmatpush1.msra.mxu0 0.0
    %159 = vmatprep.subr.mxu0 0.0
    %160 = vmatpush1.msra.mxu0 0.0
    %161 = vmatprep.subr.mxu0 0.0
    %162 = vmatpush1.msra.mxu0 0.0
    %163 = vmatprep.subr.mxu0 0.0
    %164 = vmatpush1.msra.mxu0 0.0
    %165 = vmatprep.subr.mxu0 0.0
    %166 = vmatpush1.msra.mxu0 0.0
    %167 = vmatprep.subr.mxu0 0.0
    %168 = vmatpush1.msra.mxu0 0.0
    %169 = vmatprep.subr.mxu0 0.0
    %170 = vmatpush1.msra.mxu0 0.0
    %171 = vmatprep.subr.mxu0 0.0
    %172 = vmatpush1.msra.mxu0 0.0
    %173 = vmatprep.subr.mxu0 0.0
    %174 = vmatpush1.msra.mxu0 0.0
    %175 = vmatprep.subr.mxu0 0.0
    %176 = vmatpush1.msra.mxu0 0.0
    %177 = vmatprep.subr.mxu0 0.0
    %178 = vmatpush1.msra.mxu0 0.0
    %179 = vmatprep.subr.mxu0 0.0
    %180 = vmatpush1.msra.mxu0 0.0
    %181 = vmatprep.subr.mxu0 0.0
    %182 = vmatpush1.msra.mxu0 0.0
    %183 = vmatprep.subr.mxu0 0.0
    %184 = vmatpush1.msra.mxu0 0.0
    %185 = vmatprep.subr.mxu0 0.0
    %186 = vmatpush1.msra.mxu0 0.0
    %187 = vmatprep.mubr.f32.mxu0 0.0
    %188 = vmatmul.mubr.f32.gmra.mrb[0].mxu0 %v103
    %v189 = vpop.f32.mrb[0].mxu0
    %v190 = vadd.f32 0.0, %v189
    %v191 = vpop.f32.mrb[0].mxu0
    %192 = vdwg.mxu0
    %v193 = vmul.f32 %v190, 2.0
    %v194 = vsub.f32 %v106, %v193
    %v195 = vld [vmem:[%s5] sm:$0x1]
    %v197 = vlaneseq
    %v198 = vshrl.u32 %v197, 7
    %v199 = vsub.s32 0, %v198
    %v200 = vrot.slane %v195, %v199
    %v202 = vadd.f32 %v194, %v200
    %v203 = vmax.f32 %v202, 0.0
    %v204 = vsub.f32 0.0, %v203
    %v205 = vld [vmem:[%s6] sm:$0x1]
    %v207 = vlaneseq
    %v208 = vshrl.u32 %v207, 7
    %v209 = vsub.s32 0, %v208
    %v210 = vrot.slane %v205, %v209
    %v212 = vmul.f32 %v204, %v210
    %v213 = vmul.f32 %v212, 1.442695
    %v214 = vpow.pop %v213
    %v215 = vld [vmem:[#allocation8] sm:$0xff]
    %v216 = vld [vmem:[#allocation8 + $0x8] sm:$0xff]
    %v217 = vld [vmem:[#allocation8 + $0x10] sm:$0xff]
    %v218 = vld [vmem:[#allocation8 + $0x18] sm:$0xff]
    %v219 = vld [vmem:[#allocation8 + $0x20] sm:$0xff]
    %v220 = vld [vmem:[#allocation8 + $0x28] sm:$0xff]
    %v221 = vld [vmem:[#allocation8 + $0x30] sm:$0xff]
    %v222 = vld [vmem:[#allocation8 + $0x38] sm:$0xff]
    %v223 = vld [vmem:[#allocation8 + $0x40] sm:$0xff]
    %v224 = vld [vmem:[#allocation8 + $0x48] sm:$0xff]
    %v225 = vld [vmem:[#allocation8 + $0x50] sm:$0xff]
    %v226 = vld [vmem:[#allocation8 + $0x58] sm:$0xff]
    %v227 = vld [vmem:[#allocation8 + $0x60] sm:$0xff]
    %v228 = vld [vmem:[#allocation8 + $0x68] sm:$0xff]
    %v229 = vld [vmem:[#allocation8 + $0x70] sm:$0xff]
    %v230 = vld [vmem:[#allocation8 + $0x78] sm:$0xff]
    %v231 = vld [vmem:[%s8] sm:$0x1]
    %v233 = vlaneseq
    %v234 = vshrl.u32 %v233, 7
    %v235 = vsub.s32 0, %v234
    %v236 = vrot.slane %v231, %v235
    %238 = vmatprep.subr.mxu0 0.0
    %239 = vmatpush1.msra.mxu0 %v215
    %240 = vmatprep.subr.mxu0 0.0
    %241 = vmatpush1.msra.mxu0 %v216
    %242 = vmatprep.subr.mxu0 0.0
    %243 = vmatpush1.msra.mxu0 %v217
    %244 = vmatprep.subr.mxu0 0.0
    %245 = vmatpush1.msra.mxu0 %v218
    %246 = vmatprep.subr.mxu0 0.0
    %247 = vmatpush1.msra.mxu0 %v219
    %248 = vmatprep.subr.mxu0 0.0
    %249 = vmatpush1.msra.mxu0 %v220
    %250 = vmatprep.subr.mxu0 0.0
    %251 = vmatpush1.msra.mxu0 %v221
    %252 = vmatprep.subr.mxu0 0.0
    %253 = vmatpush1.msra.mxu0 %v222
    %254 = vmatprep.subr.mxu0 0.0
    %255 = vmatpush1.msra.mxu0 %v223
    %256 = vmatprep.subr.mxu0 0.0
    %257 = vmatpush1.msra.mxu0 %v224
    %258 = vmatprep.subr.mxu0 0.0
    %259 = vmatpush1.msra.mxu0 %v225
    %260 = vmatprep.subr.mxu0 0.0
    %261 = vmatpush1.msra.mxu0 %v226
    %262 = vmatprep.subr.mxu0 0.0
    %263 = vmatpush1.msra.mxu0 %v227
    %264 = vmatprep.subr.mxu0 0.0
    %265 = vmatpush1.msra.mxu0 %v228
    %266 = vmatprep.subr.mxu0 0.0
    %267 = vmatpush1.msra.mxu0 %v229
    %268 = vmatprep.subr.mxu0 0.0
    %269 = vmatpush1.msra.mxu0 %v230
    %270 = vmatprep.subr.mxu0 0.0
    %271 = vmatpush1.msra.mxu0 0.0
    %272 = vmatprep.subr.mxu0 0.0
    %273 = vmatpush1.msra.mxu0 0.0
    %274 = vmatprep.subr.mxu0 0.0
    %275 = vmatpush1.msra.mxu0 0.0
    %276 = vmatprep.subr.mxu0 0.0
    %277 = vmatpush1.msra.mxu0 0.0
    %278 = vmatprep.subr.mxu0 0.0
    %279 = vmatpush1.msra.mxu0 0.0
    %280 = vmatprep.subr.mxu0 0.0
    %281 = vmatpush1.msra.mxu0 0.0
    %282 = vmatprep.subr.mxu0 0.0
    %283 = vmatpush1.msra.mxu0 0.0
    %284 = vmatprep.subr.mxu0 0.0
    %285 = vmatpush1.msra.mxu0 0.0
    %286 = vmatprep.subr.mxu0 0.0
    %287 = vmatpush1.msra.mxu0 0.0
    %288 = vmatprep.subr.mxu0 0.0
    %289 = vmatpush1.msra.mxu0 0.0
    %290 = vmatprep.subr.mxu0 0.0
    %291 = vmatpush1.msra.mxu0 0.0
    %292 = vmatprep.subr.mxu0 0.0
    %293 = vmatpush1.msra.mxu0 0.0
    %294 = vmatprep.subr.mxu0 0.0
    %295 = vmatpush1.msra.mxu0 0.0
    %296 = vmatprep.subr.mxu0 0.0
    %297 = vmatpush1.msra.mxu0 0.0
    %298 = vmatprep.subr.mxu0 0.0
    %299 = vmatpush1.msra.mxu0 0.0
    %300 = vmatprep.subr.mxu0 0.0
    %301 = vmatpush1.msra.mxu0 0.0
    %302 = vmatprep.mubr.f32.mxu0 0.0
    %303 = vmatmul.mubr.f32.gmra.mrb[0].mxu0 %v214
    %v304 = vpop.f32.mrb[0].mxu0
    %v305 = vadd.f32 %v236, %v304
    %v306 = vpop.f32.mrb[0].mxu0
    %307 = vdwg.mxu0
    %v308 = vxor.u32 %v305, 2147483648
    %v309 = vmul.f32 %v308, 1.442695
    %v310 = vpow.pop %v309
    %v311 = vadd.f32 %v310, 1.0
    %v312 = vrcp.pop %v311
    %v313 = vmul.f32 1.0, %v312
    %314 = vst [vmem:[#allocation10] sm:$0xff] %v313
    // Predicated region
    $region54: #{tpu_custom_call.1} parent=1 // pred_check
      _
    $region55: #{tpu_custom_call.1} parent=1 // pred_check_branch
      %316 = sbr.rel (0) target = $region57
    $region56: #{tpu_custom_call.1} parent=1 // pred_region
      %s318 = ssub.s32 128, 128
      %319 = vsyncadd [#allocation4], %s318
      %s321 = sshll.u32 [#allocation10], 4
      %s322 = int_to_ptr.vmem [resolvable:$true] %s321
      %324 = dma.vmem_to_hbm [thread:$0]  %s322, 128, %s9, [#allocation4]
    $region57: #{tpu_custom_call.1} parent=1 // pred_fallthru
      _
    // Predicated region
    $region58: #{tpu_custom_call.1} parent=1 // pred_check
      _
    $region59: #{tpu_custom_call.1} parent=1 // pred_check_branch
      %326 = sbr.rel (0) target = $region61
    $region60: #{tpu_custom_call.1} parent=1 // pred_region
      %327 = dma.done [#allocation4], 128
    $region61: #{tpu_custom_call.1} parent=1 // pred_fallthru
      _
    %328 = vsyncpa [#allocation3], 1
    %329 = vsyncpa [#allocation6], 1
    %330 = vsyncpa [#allocation9], 1
    %331 = vsyncpa [#allocation4], 1

</llo_original>
